<compile_context>
chip_gen: v5e
topology: v5e:2x2
jax: 0.10.0
libtpu: 0.0.40
codegen_flags: <defaults>
</compile_context>

<pallas_src>
import functools

import jax
import jax.numpy as jnp
from jax import lax
from jax.experimental import pallas as pl
from jax.experimental.pallas import tpu as pltpu

EMBED_DIM = 8        # conv out channels
KSIZE = 5            # conv kernel size
NUM_CLASSES = 2      # linear output features

# Packed-parameter column layout (one (EMBED_DIM, PARAM_COLS) f32 SMEM buffer):
#   cols [COL_WC, COL_WC+K)          : conv weight  wc[c, k]
#   col   COL_BC                     : conv bias    bc[c]
#   cols [COL_WL, COL_WL+2)          : linear weight * 1/L_out  (= lin_w.T / L_out)
#   cols [COL_BL, COL_BL+2) (row 0)  : linear bias  bl[j]
COL_WC = 0
COL_BC = COL_WC + KSIZE            # 5
COL_WL = COL_BC + 1                # 6
COL_BL = COL_WL + NUM_CLASSES      # 8
PARAM_COLS = 16                    # pads to one SMEM tile anyway

_MAX_T_CHUNK = 2048                # lane-aligned time chunk (multiple of 128)
_TARGET_BATCH_STEPS = 8            # >= 2 steps/core on v7x's 2 TensorCores
_VMEM_ROW_FACTOR = 10              # 2x double-buffered input + ~8x intermediates


def _device_kind():
    try:
        return jax.devices()[0].device_kind.lower()
    except Exception:
        return ""


def _default_compute_dtype():
    kind = _device_kind()
    if ("v6" in kind) or ("v7" in kind) or ("7x" in kind):
        return jnp.bfloat16          # packed bf16 VALU path (2x f32 element rate)
    return jnp.float32               # v5e and older: no bf16 VALU path


def _vmem_limit_bytes():
    kind = _device_kind()
    if ("v7" in kind) or ("7x" in kind):
        return 48 * 1024 * 1024      # v7x: 64 MiB physical, leave headroom
    if ("v5" in kind) or ("v6" in kind):
        return 96 * 1024 * 1024      # v5e/v6e: 128 MiB physical
    return 32 * 1024 * 1024          # conservative default


def _round_up(x, m):
    return ((x + m - 1) // m) * m


def _choose_tiles(B, L, vmem_budget_bytes):
    """Pick (b_tile, t_chunk) from a VMEM budget; keep >=~8 parallel batch steps."""
    t_chunk = L if L <= _MAX_T_CHUNK else _MAX_T_CHUNK
    bytes_per_row = 4 * t_chunk * _VMEM_ROW_FACTOR
    b_budget = max(8, (vmem_budget_bytes // bytes_per_row) // 8 * 8)
    if B <= 8:
        return B, t_chunk
    b_target = max(8, _round_up(-(-B // _TARGET_BATCH_STEPS), 8))
    b_cap = _round_up(B, 8)
    return min(b_budget, b_target, b_cap), t_chunk


def _cnn_kernel(params_ref, x_ref, out_ref, logit_ref, tail_ref, *,
                L, t_chunk, n_t, cdt):
    # params_ref : SMEM (EMBED_DIM, PARAM_COLS) f32, scalar-indexed
    # x_ref      : VMEM (b_tile, t_chunk) f32   (time chunk of the batch tile)
    # out_ref    : VMEM (b_tile, NUM_CLASSES) f32
    # logit_ref  : VMEM (b_tile, NUM_CLASSES) f32 accumulator scratch
    # tail_ref   : VMEM (b_tile, KSIZE-1) f32 halo carried across time chunks
    t = pl.program_id(1)
    bt = x_ref.shape[0]
    n_int = t_chunk - KSIZE + 1          # interior conv outputs in this chunk
    halo_w = KSIZE - 1

    @pl.when(t == 0)
    def _():
        ones = jnp.ones((bt, 1), jnp.float32)
        logit_ref[...] = jnp.concatenate(
            [ones * params_ref[0, COL_BL + j] for j in range(NUM_CLASSES)],
            axis=-1)                     # init accumulator with the linear bias
        if n_t > 1:
            tail_ref[...] = jnp.zeros_like(tail_ref)

    x = x_ref[...]                       # (bt, t_chunk) f32
    xc = x.astype(cdt)                   # MAC-chain dtype (bf16 on v6e/v7x)

    # Hoist the K shifted interior windows once; reused by all 8 channels.
    wins = [xc[:, k:k + n_int] for k in range(KSIZE)]

    # Mask interior positions only when the last chunk is partial (static check).
    need_int_mask = (n_t > 1) and (L % t_chunk != 0)
    if need_int_mask:
        pos = t * t_chunk + lax.broadcasted_iota(jnp.int32, (1, n_int), 1)
        int_mask = pos <= (L - KSIZE)

    if n_t > 1:
        # Boundary windows spanning previous-chunk tail + current chunk head.
        halo = jnp.concatenate(
            [tail_ref[...].astype(cdt), xc[:, :halo_w]], axis=-1)   # (bt, 2K-2)
        bwins = [halo[:, k:k + halo_w] for k in range(KSIZE)]
        bpos = (t * t_chunk - halo_w
                + lax.broadcasted_iota(jnp.int32, (1, halo_w), 1))
        bnd_mask = jnp.logical_and(bpos >= 0, bpos <= (L - KSIZE))

    part = [None] * NUM_CLASSES
    for c in range(EMBED_DIM):           # static unroll: C = 8
        wk = [params_ref[c, COL_WC + k].astype(cdt) for k in range(KSIZE)]
        bias_c = params_ref[c, COL_BC]

        # Interior conv outputs: MAC chain in `cdt`, bias/ReLU/reduce in f32.
        acc = wk[0] * wins[0]
        for k in range(1, KSIZE):        # static unroll: K = 5
            acc = acc + wk[k] * wins[k]
        act = jnp.maximum(acc.astype(jnp.float32) + bias_c, 0.0)
        if need_int_mask:
            act = jnp.where(int_mask, act, 0.0)
        s_c = jnp.sum(act, axis=-1, keepdims=True)           # (bt, 1) f32

        if n_t > 1:
            bacc = wk[0] * bwins[0]
            for k in range(1, KSIZE):
                bacc = bacc + wk[k] * bwins[k]
            bact = jnp.maximum(bacc.astype(jnp.float32) + bias_c, 0.0)
            bact = jnp.where(bnd_mask, bact, 0.0)
            s_c = s_c + jnp.sum(bact, axis=-1, keepdims=True)

        # VPU projection (scalar splat MACs); linear weight pre-scaled by 1/L_out.
        for j in range(NUM_CLASSES):
            term = s_c * params_ref[c, COL_WL + j]
            part[j] = term if part[j] is None else part[j] + term

    logit_ref[...] += jnp.concatenate(part, axis=-1)          # (bt, 2)

    if n_t > 1:
        tail_ref[...] = x[:, t_chunk - halo_w:]                # halo for next chunk

    @pl.when(t == n_t - 1)
    def _():
        # TODO(synk): emit a lane-dense (padded/transposed) output slab if stores
        # ever show up in profiles; output bytes are negligible at these shapes.
        out_ref[...] = logit_ref[...].astype(out_ref.dtype)


def pack_params(conv_w, conv_b, lin_w, lin_b, inv_lout):
    """Pack PyTorch-shaped params into one (EMBED_DIM, PARAM_COLS) f32 buffer."""
    # conv_w: (C, 1, K), conv_b: (C,), lin_w: (2, C), lin_b: (2,)
    p = jnp.zeros((EMBED_DIM, PARAM_COLS), jnp.float32)
    p = p.at[:, COL_WC:COL_WC + KSIZE].set(conv_w[:, 0, :].astype(jnp.float32))
    p = p.at[:, COL_BC].set(conv_b.astype(jnp.float32))
    # Fold the 1/L_out mean normalization into the linear weights.
    p = p.at[:, COL_WL:COL_WL + NUM_CLASSES].set(
        (lin_w.T * inv_lout).astype(jnp.float32))
    p = p.at[0, COL_BL:COL_BL + NUM_CLASSES].set(lin_b.astype(jnp.float32))
    return p


def cnn_classifier(x, conv_w, conv_b, lin_w, lin_b, *,
                   b_tile=None, t_chunk=None, compute_dtype=None):
    B, L = x.shape
    assert L >= KSIZE, "sequence length must be >= conv kernel size"

    if compute_dtype is None:
        compute_dtype = _default_compute_dtype()

    vmem_limit = _vmem_limit_bytes()
    auto_b, auto_t = _choose_tiles(B, L, vmem_budget_bytes=vmem_limit // 2)
    if b_tile is None:
        b_tile = auto_b
    if t_chunk is None:
        t_chunk = auto_t
    t_chunk = min(t_chunk, L)
    assert t_chunk == L or (t_chunk % 128 == 0 and t_chunk >= KSIZE), (
        "t_chunk must equal L or be a multiple of 128")
    assert b_tile == B or b_tile % 8 == 0, "b_tile must equal B or be a multiple of 8"

    n_b = pl.cdiv(B, b_tile)
    n_t = pl.cdiv(L, t_chunk)
    L_out = L - KSIZE + 1

    params = pack_params(conv_w, conv_b, lin_w, lin_b, 1.0 / L_out)
    kernel = functools.partial(_cnn_kernel, L=L, t_chunk=t_chunk, n_t=n_t,
                               cdt=compute_dtype)

    flops = (2 * B * EMBED_DIM * KSIZE * L_out        # conv MACs
             + 2 * B * EMBED_DIM * L_out              # bias/ReLU/reduce (approx)
             + 2 * B * EMBED_DIM * NUM_CLASSES * n_t) # projection MACs
    bytes_accessed = (x.size + params.size + B * NUM_CLASSES) * 4

    return pl.pallas_call(
        kernel,
        out_shape=jax.ShapeDtypeStruct((B, NUM_CLASSES), jnp.float32),
        grid=(n_b, n_t),
        in_specs=[
            # Single packed parameter buffer, whole array in SMEM (one tiny DMA).
            pl.BlockSpec(memory_space=pltpu.MemorySpace.SMEM),
            pl.BlockSpec((b_tile, t_chunk), lambda b, t: (b, t)),
        ],
        out_specs=pl.BlockSpec((b_tile, NUM_CLASSES), lambda b, t: (b, 0)),
        scratch_shapes=[
            pltpu.VMEM((b_tile, NUM_CLASSES), jnp.float32),   # logit accumulator
            pltpu.VMEM((b_tile, KSIZE - 1), jnp.float32),     # halo carry (K-1 cols)
        ],
        compiler_params=pltpu.CompilerParams(
            dimension_semantics=("parallel", "arbitrary"),
            vmem_limit_bytes=vmem_limit,
        ),
        cost_estimate=pl.CostEstimate(
            flops=flops, transcendentals=0, bytes_accessed=bytes_accessed),
    )(params, x)


def reference(x, conv_w, conv_b, lin_w, lin_b):
    B, L = x.shape
    C, _, K = conv_w.shape
    L_out = L - K + 1
    wc = conv_w[:, 0, :]                                           # (C, K)
    conv = sum(x[:, None, k:k + L_out] * wc[None, :, k, None] for k in range(K))
    conv = conv + conv_b[None, :, None]                            # (B, C, L_out)
    act = jnp.maximum(conv, 0.0)
    pooled = act.mean(-1)                                          # (B, C)
    return pooled @ lin_w.T + lin_b[None, :]                       # (B, 2)


if __name__ == "__main__":
    key = jax.random.PRNGKey(0)
    k_x, k_wc, k_bc, k_wl, k_bl, k_x2 = jax.random.split(key, 6)

    # PyTorch-shaped parameters (Conv1d(1, 8, 5) and Linear(8, 2)).
    conv_w = 0.1 * jax.random.normal(k_wc, (EMBED_DIM, 1, KSIZE), dtype=jnp.float32)
    conv_b = 0.1 * jax.random.normal(k_bc, (EMBED_DIM,), dtype=jnp.float32)
    lin_w = 0.1 * jax.random.normal(k_wl, (NUM_CLASSES, EMBED_DIM), dtype=jnp.float32)
    lin_b = 0.1 * jax.random.normal(k_bl, (NUM_CLASSES,), dtype=jnp.float32)

    # --- Test A: tiny shape, exact f32 path, single chunk / single batch tile.
    B1, L1 = 2, 16
    x1 = jax.random.normal(k_x, (B1, L1), dtype=jnp.float32)
    out1 = jax.block_until_ready(
        cnn_classifier(x1, conv_w, conv_b, lin_w, lin_b,
                       compute_dtype=jnp.float32))
    ref1 = reference(x1, conv_w, conv_b, lin_w, lin_b)
    assert out1.shape == (B1, NUM_CLASSES)
    assert jnp.allclose(out1, ref1, atol=1e-5, rtol=1e-5), (out1, ref1)

    # --- Test B: exercises the tiled path: 2 parallel batch steps, 4 time chunks
    # (last one partial -> masking + halo carry), auto compute dtype
    # (bf16 MACs on v6e/v7x, f32 on v5e and older).
    B2, L2 = 16, 400
    x2 = jax.random.normal(k_x2, (B2, L2), dtype=jnp.float32)
    cdt = _default_compute_dtype()
    out2 = jax.block_until_ready(
        cnn_classifier(x2, conv_w, conv_b, lin_w, lin_b,
                       b_tile=8, t_chunk=128, compute_dtype=cdt))
    ref2 = reference(x2, conv_w, conv_b, lin_w, lin_b)
    tol = 1e-5 if cdt == jnp.float32 else 2e-2
    assert out2.shape == (B2, NUM_CLASSES)
    assert jnp.allclose(out2, ref2, atol=tol, rtol=tol), (out2, ref2)

    print("KERNEL_OK")
</pallas_src>

<mosaic_0001>
module attributes {stable_mosaic.version = 11 : i64} {
  func.func @_cnn_kernel(%arg0: i32, %arg1: i32, %arg2: memref<8x16xf32, #tpu.memory_space<smem>>, %arg3: memref<2x16xf32, #tpu.memory_space<vmem>>, %arg4: memref<2x2xf32, #tpu.memory_space<vmem>>, %arg5: memref<2x2xf32, #tpu.memory_space<vmem>>, %arg6: memref<2x4xf32, #tpu.memory_space<vmem>>) attributes {dimension_semantics = [#tpu.dimension_semantics<parallel>, #tpu.dimension_semantics<arbitrary>], iteration_bounds = array<i64: 1, 1>, scalar_prefetch = 0 : i64, scratch_operands = 2 : i64, tpu.core_type = #tpu.core_type<tc>, window_params = [{transform_indices = @transform_0, window_bounds = array<i64: 8, 16>}, {transform_indices = @transform_1, window_bounds = array<i64: 2, 16>}, {transform_indices = @transform_2, window_bounds = array<i64: 2, 2>}]} {
    %c0_i32 = arith.constant 0 : i32
    %0 = arith.cmpi eq, %arg1, %c0_i32 : i32
    %1 = arith.extui %0 : i1 to i32
    %c0_i32_0 = arith.constant 0 : i32
    %2 = arith.cmpi ne, %1, %c0_i32_0 : i32
    scf.if %2 {
      %cst_144 = arith.constant 1.000000e+00 : f32
      %286 = vector.broadcast %cst_144 : f32 to vector<2x1xf32>
      %c0_145 = arith.constant 0 : index
      %c8 = arith.constant 8 : index
      %287 = memref.load %arg2[%c0_145, %c8] : memref<8x16xf32, #tpu.memory_space<smem>>
      %288 = vector.broadcast %287 : f32 to vector<2x1xf32>
      %289 = arith.mulf %286, %288 : vector<2x1xf32>
      %c0_146 = arith.constant 0 : index
      %c9 = arith.constant 9 : index
      %290 = memref.load %arg2[%c0_146, %c9] : memref<8x16xf32, #tpu.memory_space<smem>>
      %291 = vector.broadcast %290 : f32 to vector<2x1xf32>
      %292 = arith.mulf %286, %291 : vector<2x1xf32>
      %293 = tpu.concatenate %289, %292 in 1 : vector<2x1xf32>, vector<2x1xf32> -> vector<2x2xf32>
      %c0_147 = arith.constant 0 : index
      %c0_148 = arith.constant 0 : index
      %294 = vector.load %arg5[%c0_147, %c0_148] : memref<2x2xf32, #tpu.memory_space<vmem>>, vector<2x2xf32>
      tpu.vector_store %arg5[%c0_147, %c0_148], %293 {strides = array<i32>} : memref<2x2xf32, #tpu.memory_space<vmem>>, vector<2x2xf32>,
    } else {
    }
    %c0 = arith.constant 0 : index
    %c0_1 = arith.constant 0 : index
    %3 = vector.load %arg3[%c0, %c0_1] : memref<2x16xf32, #tpu.memory_space<vmem>>, vector<2x16xf32>
    %4 = vector.extract_strided_slice %3 {offsets = [0, 0], sizes = [2, 12], strides = [1, 1]} : vector<2x16xf32> to vector<2x12xf32>
    %5 = vector.extract_strided_slice %3 {offsets = [0, 1], sizes = [2, 12], strides = [1, 1]} : vector<2x16xf32> to vector<2x12xf32>
    %6 = vector.extract_strided_slice %3 {offsets = [0, 2], sizes = [2, 12], strides = [1, 1]} : vector<2x16xf32> to vector<2x12xf32>
    %7 = vector.extract_strided_slice %3 {offsets = [0, 3], sizes = [2, 12], strides = [1, 1]} : vector<2x16xf32> to vector<2x12xf32>
    %8 = vector.extract_strided_slice %3 {offsets = [0, 4], sizes = [2, 12], strides = [1, 1]} : vector<2x16xf32> to vector<2x12xf32>
    %c0_2 = arith.constant 0 : index
    %c0_3 = arith.constant 0 : index
    %9 = memref.load %arg2[%c0_2, %c0_3] : memref<8x16xf32, #tpu.memory_space<smem>>
    %c0_4 = arith.constant 0 : index
    %c1 = arith.constant 1 : index
    %10 = memref.load %arg2[%c0_4, %c1] : memref<8x16xf32, #tpu.memory_space<smem>>
    %c0_5 = arith.constant 0 : index
    %c2 = arith.constant 2 : index
    %11 = memref.load %arg2[%c0_5, %c2] : memref<8x16xf32, #tpu.memory_space<smem>>
    %c0_6 = arith.constant 0 : index
    %c3 = arith.constant 3 : index
    %12 = memref.load %arg2[%c0_6, %c3] : memref<8x16xf32, #tpu.memory_space<smem>>
    %c0_7 = arith.constant 0 : index
    %c4 = arith.constant 4 : index
    %13 = memref.load %arg2[%c0_7, %c4] : memref<8x16xf32, #tpu.memory_space<smem>>
    %c0_8 = arith.constant 0 : index
    %c5 = arith.constant 5 : index
    %14 = memref.load %arg2[%c0_8, %c5] : memref<8x16xf32, #tpu.memory_space<smem>>
    %15 = vector.broadcast %9 : f32 to vector<2x12xf32>
    %16 = arith.mulf %15, %4 : vector<2x12xf32>
    %17 = vector.broadcast %10 : f32 to vector<2x12xf32>
    %18 = arith.mulf %17, %5 : vector<2x12xf32>
    %19 = arith.addf %16, %18 : vector<2x12xf32>
    %20 = vector.broadcast %11 : f32 to vector<2x12xf32>
    %21 = arith.mulf %20, %6 : vector<2x12xf32>
    %22 = arith.addf %19, %21 : vector<2x12xf32>
    %23 = vector.broadcast %12 : f32 to vector<2x12xf32>
    %24 = arith.mulf %23, %7 : vector<2x12xf32>
    %25 = arith.addf %22, %24 : vector<2x12xf32>
    %26 = vector.broadcast %13 : f32 to vector<2x12xf32>
    %27 = arith.mulf %26, %8 : vector<2x12xf32>
    %28 = arith.addf %25, %27 : vector<2x12xf32>
    %29 = vector.broadcast %14 : f32 to vector<2x12xf32>
    %30 = arith.addf %28, %29 : vector<2x12xf32>
    %cst = arith.constant 0.000000e+00 : f32
    %31 = vector.broadcast %cst : f32 to vector<2x12xf32>
    %32 = arith.maximumf %30, %31 : vector<2x12xf32>
    %cst_9 = arith.constant dense<0.000000e+00> : vector<2xf32>
    %33 = vector.multi_reduction <add>, %32, %cst_9 [1] : vector<2x12xf32> to vector<2xf32>
    %34 = vector.shape_cast %33 : vector<2xf32> to vector<2x1xf32>
    %c0_10 = arith.constant 0 : index
    %c6 = arith.constant 6 : index
    %35 = memref.load %arg2[%c0_10, %c6] : memref<8x16xf32, #tpu.memory_space<smem>>
    %36 = vector.broadcast %35 : f32 to vector<2x1xf32>
    %37 = arith.mulf %34, %36 : vector<2x1xf32>
    %c0_11 = arith.constant 0 : index
    %c7 = arith.constant 7 : index
    %38 = memref.load %arg2[%c0_11, %c7] : memref<8x16xf32, #tpu.memory_space<smem>>
    %39 = vector.broadcast %38 : f32 to vector<2x1xf32>
    %40 = arith.mulf %34, %39 : vector<2x1xf32>
    %c1_12 = arith.constant 1 : index
    %c0_13 = arith.constant 0 : index
    %41 = memref.load %arg2[%c1_12, %c0_13] : memref<8x16xf32, #tpu.memory_space<smem>>
    %c1_14 = arith.constant 1 : index
    %c1_15 = arith.constant 1 : index
    %42 = memref.load %arg2[%c1_14, %c1_15] : memref<8x16xf32, #tpu.memory_space<smem>>
    %c1_16 = arith.constant 1 : index
    %c2_17 = arith.constant 2 : index
    %43 = memref.load %arg2[%c1_16, %c2_17] : memref<8x16xf32, #tpu.memory_space<smem>>
    %c1_18 = arith.constant 1 : index
    %c3_19 = arith.constant 3 : index
    %44 = memref.load %arg2[%c1_18, %c3_19] : memref<8x16xf32, #tpu.memory_space<smem>>
    %c1_20 = arith.constant 1 : index
    %c4_21 = arith.constant 4 : index
    %45 = memref.load %arg2[%c1_20, %c4_21] : memref<8x16xf32, #tpu.memory_space<smem>>
    %c1_22 = arith.constant 1 : index
    %c5_23 = arith.constant 5 : index
    %46 = memref.load %arg2[%c1_22, %c5_23] : memref<8x16xf32, #tpu.memory_space<smem>>
    %47 = vector.broadcast %41 : f32 to vector<2x12xf32>
    %48 = arith.mulf %47, %4 : vector<2x12xf32>
    %49 = vector.broadcast %42 : f32 to vector<2x12xf32>
    %50 = arith.mulf %49, %5 : vector<2x12xf32>
    %51 = arith.addf %48, %50 : vector<2x12xf32>
    %52 = vector.broadcast %43 : f32 to vector<2x12xf32>
    %53 = arith.mulf %52, %6 : vector<2x12xf32>
    %54 = arith.addf %51, %53 : vector<2x12xf32>
    %55 = vector.broadcast %44 : f32 to vector<2x12xf32>
    %56 = arith.mulf %55, %7 : vector<2x12xf32>
    %57 = arith.addf %54, %56 : vector<2x12xf32>
    %58 = vector.broadcast %45 : f32 to vector<2x12xf32>
    %59 = arith.mulf %58, %8 : vector<2x12xf32>
    %60 = arith.addf %57, %59 : vector<2x12xf32>
    %61 = vector.broadcast %46 : f32 to vector<2x12xf32>
    %62 = arith.addf %60, %61 : vector<2x12xf32>
    %cst_24 = arith.constant 0.000000e+00 : f32
    %63 = vector.broadcast %cst_24 : f32 to vector<2x12xf32>
    %64 = arith.maximumf %62, %63 : vector<2x12xf32>
    %cst_25 = arith.constant dense<0.000000e+00> : vector<2xf32>
    %65 = vector.multi_reduction <add>, %64, %cst_25 [1] : vector<2x12xf32> to vector<2xf32>
    %66 = vector.shape_cast %65 : vector<2xf32> to vector<2x1xf32>
    %c1_26 = arith.constant 1 : index
    %c6_27 = arith.constant 6 : index
    %67 = memref.load %arg2[%c1_26, %c6_27] : memref<8x16xf32, #tpu.memory_space<smem>>
    %68 = vector.broadcast %67 : f32 to vector<2x1xf32>
    %69 = arith.mulf %66, %68 : vector<2x1xf32>
    %70 = arith.addf %37, %69 : vector<2x1xf32>
    %c1_28 = arith.constant 1 : index
    %c7_29 = arith.constant 7 : index
    %71 = memref.load %arg2[%c1_28, %c7_29] : memref<8x16xf32, #tpu.memory_space<smem>>
    %72 = vector.broadcast %71 : f32 to vector<2x1xf32>
    %73 = arith.mulf %66, %72 : vector<2x1xf32>
    %74 = arith.addf %40, %73 : vector<2x1xf32>
    %c2_30 = arith.constant 2 : index
    %c0_31 = arith.constant 0 : index
    %75 = memref.load %arg2[%c2_30, %c0_31] : memref<8x16xf32, #tpu.memory_space<smem>>
    %c2_32 = arith.constant 2 : index
    %c1_33 = arith.constant 1 : index
    %76 = memref.load %arg2[%c2_32, %c1_33] : memref<8x16xf32, #tpu.memory_space<smem>>
    %c2_34 = arith.constant 2 : index
    %c2_35 = arith.constant 2 : index
    %77 = memref.load %arg2[%c2_34, %c2_35] : memref<8x16xf32, #tpu.memory_space<smem>>
    %c2_36 = arith.constant 2 : index
    %c3_37 = arith.constant 3 : index
    %78 = memref.load %arg2[%c2_36, %c3_37] : memref<8x16xf32, #tpu.memory_space<smem>>
    %c2_38 = arith.constant 2 : index
    %c4_39 = arith.constant 4 : index
    %79 = memref.load %arg2[%c2_38, %c4_39] : memref<8x16xf32, #tpu.memory_space<smem>>
    %c2_40 = arith.constant 2 : index
    %c5_41 = arith.constant 5 : index
    %80 = memref.load %arg2[%c2_40, %c5_41] : memref<8x16xf32, #tpu.memory_space<smem>>
    %81 = vector.broadcast %75 : f32 to vector<2x12xf32>
    %82 = arith.mulf %81, %4 : vector<2x12xf32>
    %83 = vector.broadcast %76 : f32 to vector<2x12xf32>
    %84 = arith.mulf %83, %5 : vector<2x12xf32>
    %85 = arith.addf %82, %84 : vector<2x12xf32>
    %86 = vector.broadcast %77 : f32 to vector<2x12xf32>
    %87 = arith.mulf %86, %6 : vector<2x12xf32>
    %88 = arith.addf %85, %87 : vector<2x12xf32>
    %89 = vector.broadcast %78 : f32 to vector<2x12xf32>
    %90 = arith.mulf %89, %7 : vector<2x12xf32>
    %91 = arith.addf %88, %90 : vector<2x12xf32>
    %92 = vector.broadcast %79 : f32 to vector<2x12xf32>
    %93 = arith.mulf %92, %8 : vector<2x12xf32>
    %94 = arith.addf %91, %93 : vector<2x12xf32>
    %95 = vector.broadcast %80 : f32 to vector<2x12xf32>
    %96 = arith.addf %94, %95 : vector<2x12xf32>
    %cst_42 = arith.constant 0.000000e+00 : f32
    %97 = vector.broadcast %cst_42 : f32 to vector<2x12xf32>
    %98 = arith.maximumf %96, %97 : vector<2x12xf32>
    %cst_43 = arith.constant dense<0.000000e+00> : vector<2xf32>
    %99 = vector.multi_reduction <add>, %98, %cst_43 [1] : vector<2x12xf32> to vector<2xf32>
    %100 = vector.shape_cast %99 : vector<2xf32> to vector<2x1xf32>
    %c2_44 = arith.constant 2 : index
    %c6_45 = arith.constant 6 : index
    %101 = memref.load %arg2[%c2_44, %c6_45] : memref<8x16xf32, #tpu.memory_space<smem>>
    %102 = vector.broadcast %101 : f32 to vector<2x1xf32>
    %103 = arith.mulf %100, %102 : vector<2x1xf32>
    %104 = arith.addf %70, %103 : vector<2x1xf32>
    %c2_46 = arith.constant 2 : index
    %c7_47 = arith.constant 7 : index
    %105 = memref.load %arg2[%c2_46, %c7_47] : memref<8x16xf32, #tpu.memory_space<smem>>
    %106 = vector.broadcast %105 : f32 to vector<2x1xf32>
    %107 = arith.mulf %100, %106 : vector<2x1xf32>
    %108 = arith.addf %74, %107 : vector<2x1xf32>
    %c3_48 = arith.constant 3 : index
    %c0_49 = arith.constant 0 : index
    %109 = memref.load %arg2[%c3_48, %c0_49] : memref<8x16xf32, #tpu.memory_space<smem>>
    %c3_50 = arith.constant 3 : index
    %c1_51 = arith.constant 1 : index
    %110 = memref.load %arg2[%c3_50, %c1_51] : memref<8x16xf32, #tpu.memory_space<smem>>
    %c3_52 = arith.constant 3 : index
    %c2_53 = arith.constant 2 : index
    %111 = memref.load %arg2[%c3_52, %c2_53] : memref<8x16xf32, #tpu.memory_space<smem>>
    %c3_54 = arith.constant 3 : index
    %c3_55 = arith.constant 3 : index
    %112 = memref.load %arg2[%c3_54, %c3_55] : memref<8x16xf32, #tpu.memory_space<smem>>
    %c3_56 = arith.constant 3 : index
    %c4_57 = arith.constant 4 : index
    %113 = memref.load %arg2[%c3_56, %c4_57] : memref<8x16xf32, #tpu.memory_space<smem>>
    %c3_58 = arith.constant 3 : index
    %c5_59 = arith.constant 5 : index
    %114 = memref.load %arg2[%c3_58, %c5_59] : memref<8x16xf32, #tpu.memory_space<smem>>
    %115 = vector.broadcast %109 : f32 to vector<2x12xf32>
    %116 = arith.mulf %115, %4 : vector<2x12xf32>
    %117 = vector.broadcast %110 : f32 to vector<2x12xf32>
    %118 = arith.mulf %117, %5 : vector<2x12xf32>
    %119 = arith.addf %116, %118 : vector<2x12xf32>
    %120 = vector.broadcast %111 : f32 to vector<2x12xf32>
    %121 = arith.mulf %120, %6 : vector<2x12xf32>
    %122 = arith.addf %119, %121 : vector<2x12xf32>
    %123 = vector.broadcast %112 : f32 to vector<2x12xf32>
    %124 = arith.mulf %123, %7 : vector<2x12xf32>
    %125 = arith.addf %122, %124 : vector<2x12xf32>
    %126 = vector.broadcast %113 : f32 to vector<2x12xf32>
    %127 = arith.mulf %126, %8 : vector<2x12xf32>
    %128 = arith.addf %125, %127 : vector<2x12xf32>
    %129 = vector.broadcast %114 : f32 to vector<2x12xf32>
    %130 = arith.addf %128, %129 : vector<2x12xf32>
    %cst_60 = arith.constant 0.000000e+00 : f32
    %131 = vector.broadcast %cst_60 : f32 to vector<2x12xf32>
    %132 = arith.maximumf %130, %131 : vector<2x12xf32>
    %cst_61 = arith.constant dense<0.000000e+00> : vector<2xf32>
    %133 = vector.multi_reduction <add>, %132, %cst_61 [1] : vector<2x12xf32> to vector<2xf32>
    %134 = vector.shape_cast %133 : vector<2xf32> to vector<2x1xf32>
    %c3_62 = arith.constant 3 : index
    %c6_63 = arith.constant 6 : index
    %135 = memref.load %arg2[%c3_62, %c6_63] : memref<8x16xf32, #tpu.memory_space<smem>>
    %136 = vector.broadcast %135 : f32 to vector<2x1xf32>
    %137 = arith.mulf %134, %136 : vector<2x1xf32>
    %138 = arith.addf %104, %137 : vector<2x1xf32>
    %c3_64 = arith.constant 3 : index
    %c7_65 = arith.constant 7 : index
    %139 = memref.load %arg2[%c3_64, %c7_65] : memref<8x16xf32, #tpu.memory_space<smem>>
    %140 = vector.broadcast %139 : f32 to vector<2x1xf32>
    %141 = arith.mulf %134, %140 : vector<2x1xf32>
    %142 = arith.addf %108, %141 : vector<2x1xf32>
    %c4_66 = arith.constant 4 : index
    %c0_67 = arith.constant 0 : index
    %143 = memref.load %arg2[%c4_66, %c0_67] : memref<8x16xf32, #tpu.memory_space<smem>>
    %c4_68 = arith.constant 4 : index
    %c1_69 = arith.constant 1 : index
    %144 = memref.load %arg2[%c4_68, %c1_69] : memref<8x16xf32, #tpu.memory_space<smem>>
    %c4_70 = arith.constant 4 : index
    %c2_71 = arith.constant 2 : index
    %145 = memref.load %arg2[%c4_70, %c2_71] : memref<8x16xf32, #tpu.memory_space<smem>>
    %c4_72 = arith.constant 4 : index
    %c3_73 = arith.constant 3 : index
    %146 = memref.load %arg2[%c4_72, %c3_73] : memref<8x16xf32, #tpu.memory_space<smem>>
    %c4_74 = arith.constant 4 : index
    %c4_75 = arith.constant 4 : index
    %147 = memref.load %arg2[%c4_74, %c4_75] : memref<8x16xf32, #tpu.memory_space<smem>>
    %c4_76 = arith.constant 4 : index
    %c5_77 = arith.constant 5 : index
    %148 = memref.load %arg2[%c4_76, %c5_77] : memref<8x16xf32, #tpu.memory_space<smem>>
    %149 = vector.broadcast %143 : f32 to vector<2x12xf32>
    %150 = arith.mulf %149, %4 : vector<2x12xf32>
    %151 = vector.broadcast %144 : f32 to vector<2x12xf32>
    %152 = arith.mulf %151, %5 : vector<2x12xf32>
    %153 = arith.addf %150, %152 : vector<2x12xf32>
    %154 = vector.broadcast %145 : f32 to vector<2x12xf32>
    %155 = arith.mulf %154, %6 : vector<2x12xf32>
    %156 = arith.addf %153, %155 : vector<2x12xf32>
    %157 = vector.broadcast %146 : f32 to vector<2x12xf32>
    %158 = arith.mulf %157, %7 : vector<2x12xf32>
    %159 = arith.addf %156, %158 : vector<2x12xf32>
    %160 = vector.broadcast %147 : f32 to vector<2x12xf32>
    %161 = arith.mulf %160, %8 : vector<2x12xf32>
    %162 = arith.addf %159, %161 : vector<2x12xf32>
    %163 = vector.broadcast %148 : f32 to vector<2x12xf32>
    %164 = arith.addf %162, %163 : vector<2x12xf32>
    %cst_78 = arith.constant 0.000000e+00 : f32
    %165 = vector.broadcast %cst_78 : f32 to vector<2x12xf32>
    %166 = arith.maximumf %164, %165 : vector<2x12xf32>
    %cst_79 = arith.constant dense<0.000000e+00> : vector<2xf32>
    %167 = vector.multi_reduction <add>, %166, %cst_79 [1] : vector<2x12xf32> to vector<2xf32>
    %168 = vector.shape_cast %167 : vector<2xf32> to vector<2x1xf32>
    %c4_80 = arith.constant 4 : index
    %c6_81 = arith.constant 6 : index
    %169 = memref.load %arg2[%c4_80, %c6_81] : memref<8x16xf32, #tpu.memory_space<smem>>
    %170 = vector.broadcast %169 : f32 to vector<2x1xf32>
    %171 = arith.mulf %168, %170 : vector<2x1xf32>
    %172 = arith.addf %138, %171 : vector<2x1xf32>
    %c4_82 = arith.constant 4 : index
    %c7_83 = arith.constant 7 : index
    %173 = memref.load %arg2[%c4_82, %c7_83] : memref<8x16xf32, #tpu.memory_space<smem>>
    %174 = vector.broadcast %173 : f32 to vector<2x1xf32>
    %175 = arith.mulf %168, %174 : vector<2x1xf32>
    %176 = arith.addf %142, %175 : vector<2x1xf32>
    %c5_84 = arith.constant 5 : index
    %c0_85 = arith.constant 0 : index
    %177 = memref.load %arg2[%c5_84, %c0_85] : memref<8x16xf32, #tpu.memory_space<smem>>
    %c5_86 = arith.constant 5 : index
    %c1_87 = arith.constant 1 : index
    %178 = memref.load %arg2[%c5_86, %c1_87] : memref<8x16xf32, #tpu.memory_space<smem>>
    %c5_88 = arith.constant 5 : index
    %c2_89 = arith.constant 2 : index
    %179 = memref.load %arg2[%c5_88, %c2_89] : memref<8x16xf32, #tpu.memory_space<smem>>
    %c5_90 = arith.constant 5 : index
    %c3_91 = arith.constant 3 : index
    %180 = memref.load %arg2[%c5_90, %c3_91] : memref<8x16xf32, #tpu.memory_space<smem>>
    %c5_92 = arith.constant 5 : index
    %c4_93 = arith.constant 4 : index
    %181 = memref.load %arg2[%c5_92, %c4_93] : memref<8x16xf32, #tpu.memory_space<smem>>
    %c5_94 = arith.constant 5 : index
    %c5_95 = arith.constant 5 : index
    %182 = memref.load %arg2[%c5_94, %c5_95] : memref<8x16xf32, #tpu.memory_space<smem>>
    %183 = vector.broadcast %177 : f32 to vector<2x12xf32>
    %184 = arith.mulf %183, %4 : vector<2x12xf32>
    %185 = vector.broadcast %178 : f32 to vector<2x12xf32>
    %186 = arith.mulf %185, %5 : vector<2x12xf32>
    %187 = arith.addf %184, %186 : vector<2x12xf32>
    %188 = vector.broadcast %179 : f32 to vector<2x12xf32>
    %189 = arith.mulf %188, %6 : vector<2x12xf32>
    %190 = arith.addf %187, %189 : vector<2x12xf32>
    %191 = vector.broadcast %180 : f32 to vector<2x12xf32>
    %192 = arith.mulf %191, %7 : vector<2x12xf32>
    %193 = arith.addf %190, %192 : vector<2x12xf32>
    %194 = vector.broadcast %181 : f32 to vector<2x12xf32>
    %195 = arith.mulf %194, %8 : vector<2x12xf32>
    %196 = arith.addf %193, %195 : vector<2x12xf32>
    %197 = vector.broadcast %182 : f32 to vector<2x12xf32>
    %198 = arith.addf %196, %197 : vector<2x12xf32>
    %cst_96 = arith.constant 0.000000e+00 : f32
    %199 = vector.broadcast %cst_96 : f32 to vector<2x12xf32>
    %200 = arith.maximumf %198, %199 : vector<2x12xf32>
    %cst_97 = arith.constant dense<0.000000e+00> : vector<2xf32>
    %201 = vector.multi_reduction <add>, %200, %cst_97 [1] : vector<2x12xf32> to vector<2xf32>
    %202 = vector.shape_cast %201 : vector<2xf32> to vector<2x1xf32>
    %c5_98 = arith.constant 5 : index
    %c6_99 = arith.constant 6 : index
    %203 = memref.load %arg2[%c5_98, %c6_99] : memref<8x16xf32, #tpu.memory_space<smem>>
    %204 = vector.broadcast %203 : f32 to vector<2x1xf32>
    %205 = arith.mulf %202, %204 : vector<2x1xf32>
    %206 = arith.addf %172, %205 : vector<2x1xf32>
    %c5_100 = arith.constant 5 : index
    %c7_101 = arith.constant 7 : index
    %207 = memref.load %arg2[%c5_100, %c7_101] : memref<8x16xf32, #tpu.memory_space<smem>>
    %208 = vector.broadcast %207 : f32 to vector<2x1xf32>
    %209 = arith.mulf %202, %208 : vector<2x1xf32>
    %210 = arith.addf %176, %209 : vector<2x1xf32>
    %c6_102 = arith.constant 6 : index
    %c0_103 = arith.constant 0 : index
    %211 = memref.load %arg2[%c6_102, %c0_103] : memref<8x16xf32, #tpu.memory_space<smem>>
    %c6_104 = arith.constant 6 : index
    %c1_105 = arith.constant 1 : index
    %212 = memref.load %arg2[%c6_104, %c1_105] : memref<8x16xf32, #tpu.memory_space<smem>>
    %c6_106 = arith.constant 6 : index
    %c2_107 = arith.constant 2 : index
    %213 = memref.load %arg2[%c6_106, %c2_107] : memref<8x16xf32, #tpu.memory_space<smem>>
    %c6_108 = arith.constant 6 : index
    %c3_109 = arith.constant 3 : index
    %214 = memref.load %arg2[%c6_108, %c3_109] : memref<8x16xf32, #tpu.memory_space<smem>>
    %c6_110 = arith.constant 6 : index
    %c4_111 = arith.constant 4 : index
    %215 = memref.load %arg2[%c6_110, %c4_111] : memref<8x16xf32, #tpu.memory_space<smem>>
    %c6_112 = arith.constant 6 : index
    %c5_113 = arith.constant 5 : index
    %216 = memref.load %arg2[%c6_112, %c5_113] : memref<8x16xf32, #tpu.memory_space<smem>>
    %217 = vector.broadcast %211 : f32 to vector<2x12xf32>
    %218 = arith.mulf %217, %4 : vector<2x12xf32>
    %219 = vector.broadcast %212 : f32 to vector<2x12xf32>
    %220 = arith.mulf %219, %5 : vector<2x12xf32>
    %221 = arith.addf %218, %220 : vector<2x12xf32>
    %222 = vector.broadcast %213 : f32 to vector<2x12xf32>
    %223 = arith.mulf %222, %6 : vector<2x12xf32>
    %224 = arith.addf %221, %223 : vector<2x12xf32>
    %225 = vector.broadcast %214 : f32 to vector<2x12xf32>
    %226 = arith.mulf %225, %7 : vector<2x12xf32>
    %227 = arith.addf %224, %226 : vector<2x12xf32>
    %228 = vector.broadcast %215 : f32 to vector<2x12xf32>
    %229 = arith.mulf %228, %8 : vector<2x12xf32>
    %230 = arith.addf %227, %229 : vector<2x12xf32>
    %231 = vector.broadcast %216 : f32 to vector<2x12xf32>
    %232 = arith.addf %230, %231 : vector<2x12xf32>
    %cst_114 = arith.constant 0.000000e+00 : f32
    %233 = vector.broadcast %cst_114 : f32 to vector<2x12xf32>
    %234 = arith.maximumf %232, %233 : vector<2x12xf32>
    %cst_115 = arith.constant dense<0.000000e+00> : vector<2xf32>
    %235 = vector.multi_reduction <add>, %234, %cst_115 [1] : vector<2x12xf32> to vector<2xf32>
    %236 = vector.shape_cast %235 : vector<2xf32> to vector<2x1xf32>
    %c6_116 = arith.constant 6 : index
    %c6_117 = arith.constant 6 : index
    %237 = memref.load %arg2[%c6_116, %c6_117] : memref<8x16xf32, #tpu.memory_space<smem>>
    %238 = vector.broadcast %237 : f32 to vector<2x1xf32>
    %239 = arith.mulf %236, %238 : vector<2x1xf32>
    %240 = arith.addf %206, %239 : vector<2x1xf32>
    %c6_118 = arith.constant 6 : index
    %c7_119 = arith.constant 7 : index
    %241 = memref.load %arg2[%c6_118, %c7_119] : memref<8x16xf32, #tpu.memory_space<smem>>
    %242 = vector.broadcast %241 : f32 to vector<2x1xf32>
    %243 = arith.mulf %236, %242 : vector<2x1xf32>
    %244 = arith.addf %210, %243 : vector<2x1xf32>
    %c7_120 = arith.constant 7 : index
    %c0_121 = arith.constant 0 : index
    %245 = memref.load %arg2[%c7_120, %c0_121] : memref<8x16xf32, #tpu.memory_space<smem>>
    %c7_122 = arith.constant 7 : index
    %c1_123 = arith.constant 1 : index
    %246 = memref.load %arg2[%c7_122, %c1_123] : memref<8x16xf32, #tpu.memory_space<smem>>
    %c7_124 = arith.constant 7 : index
    %c2_125 = arith.constant 2 : index
    %247 = memref.load %arg2[%c7_124, %c2_125] : memref<8x16xf32, #tpu.memory_space<smem>>
    %c7_126 = arith.constant 7 : index
    %c3_127 = arith.constant 3 : index
    %248 = memref.load %arg2[%c7_126, %c3_127] : memref<8x16xf32, #tpu.memory_space<smem>>
    %c7_128 = arith.constant 7 : index
    %c4_129 = arith.constant 4 : index
    %249 = memref.load %arg2[%c7_128, %c4_129] : memref<8x16xf32, #tpu.memory_space<smem>>
    %c7_130 = arith.constant 7 : index
    %c5_131 = arith.constant 5 : index
    %250 = memref.load %arg2[%c7_130, %c5_131] : memref<8x16xf32, #tpu.memory_space<smem>>
    %251 = vector.broadcast %245 : f32 to vector<2x12xf32>
    %252 = arith.mulf %251, %4 : vector<2x12xf32>
    %253 = vector.broadcast %246 : f32 to vector<2x12xf32>
    %254 = arith.mulf %253, %5 : vector<2x12xf32>
    %255 = arith.addf %252, %254 : vector<2x12xf32>
    %256 = vector.broadcast %247 : f32 to vector<2x12xf32>
    %257 = arith.mulf %256, %6 : vector<2x12xf32>
    %258 = arith.addf %255, %257 : vector<2x12xf32>
    %259 = vector.broadcast %248 : f32 to vector<2x12xf32>
    %260 = arith.mulf %259, %7 : vector<2x12xf32>
    %261 = arith.addf %258, %260 : vector<2x12xf32>
    %262 = vector.broadcast %249 : f32 to vector<2x12xf32>
    %263 = arith.mulf %262, %8 : vector<2x12xf32>
    %264 = arith.addf %261, %263 : vector<2x12xf32>
    %265 = vector.broadcast %250 : f32 to vector<2x12xf32>
    %266 = arith.addf %264, %265 : vector<2x12xf32>
    %cst_132 = arith.constant 0.000000e+00 : f32
    %267 = vector.broadcast %cst_132 : f32 to vector<2x12xf32>
    %268 = arith.maximumf %266, %267 : vector<2x12xf32>
    %cst_133 = arith.constant dense<0.000000e+00> : vector<2xf32>
    %269 = vector.multi_reduction <add>, %268, %cst_133 [1] : vector<2x12xf32> to vector<2xf32>
    %270 = vector.shape_cast %269 : vector<2xf32> to vector<2x1xf32>
    %c7_134 = arith.constant 7 : index
    %c6_135 = arith.constant 6 : index
    %271 = memref.load %arg2[%c7_134, %c6_135] : memref<8x16xf32, #tpu.memory_space<smem>>
    %272 = vector.broadcast %271 : f32 to vector<2x1xf32>
    %273 = arith.mulf %270, %272 : vector<2x1xf32>
    %274 = arith.addf %240, %273 : vector<2x1xf32>
    %c7_136 = arith.constant 7 : index
    %c7_137 = arith.constant 7 : index
    %275 = memref.load %arg2[%c7_136, %c7_137] : memref<8x16xf32, #tpu.memory_space<smem>>
    %276 = vector.broadcast %275 : f32 to vector<2x1xf32>
    %277 = arith.mulf %270, %276 : vector<2x1xf32>
    %278 = arith.addf %244, %277 : vector<2x1xf32>
    %c0_138 = arith.constant 0 : index
    %c0_139 = arith.constant 0 : index
    %279 = vector.load %arg5[%c0_138, %c0_139] : memref<2x2xf32, #tpu.memory_space<vmem>>, vector<2x2xf32>
    %280 = tpu.concatenate %274, %278 in 1 : vector<2x1xf32>, vector<2x1xf32> -> vector<2x2xf32>
    %281 = arith.addf %279, %280 : vector<2x2xf32>
    %c0_140 = arith.constant 0 : index
    %c0_141 = arith.constant 0 : index
    %282 = vector.load %arg5[%c0_140, %c0_141] : memref<2x2xf32, #tpu.memory_space<vmem>>, vector<2x2xf32>
    tpu.vector_store %arg5[%c0_140, %c0_141], %281 {strides = array<i32>} : memref<2x2xf32, #tpu.memory_space<vmem>>, vector<2x2xf32>,
    %c0_i32_142 = arith.constant 0 : i32
    %283 = arith.cmpi eq, %arg1, %c0_i32_142 : i32
    %284 = arith.extui %283 : i1 to i32
    %c0_i32_143 = arith.constant 0 : i32
    %285 = arith.cmpi ne, %284, %c0_i32_143 : i32
    scf.if %285 {
      %c0_144 = arith.constant 0 : index
      %c0_145 = arith.constant 0 : index
      %286 = vector.load %arg5[%c0_144, %c0_145] : memref<2x2xf32, #tpu.memory_space<vmem>>, vector<2x2xf32>
      %c0_146 = arith.constant 0 : index
      %c0_147 = arith.constant 0 : index
      %287 = vector.load %arg4[%c0_146, %c0_147] : memref<2x2xf32, #tpu.memory_space<vmem>>, vector<2x2xf32>
      tpu.vector_store %arg4[%c0_146, %c0_147], %286 {strides = array<i32>} : memref<2x2xf32, #tpu.memory_space<vmem>>, vector<2x2xf32>,
    } else {
    }
    return
  }
  func.func @transform_0(%arg0: i32, %arg1: i32) -> (i32, i32) {
    %c0_i32 = arith.constant 0 : i32
    %c0_i32_0 = arith.constant 0 : i32
    %c0_i32_1 = arith.constant 0 : i32
    return %c0_i32, %c0_i32_0 : i32, i32
  }
  func.func @transform_1(%arg0: i32, %arg1: i32) -> (i32, i32) {
    %c0_i32 = arith.constant 0 : i32
    return %arg0, %arg1 : i32, i32
  }
  func.func @transform_2(%arg0: i32, %arg1: i32) -> (i32, i32) {
    %c0_i32 = arith.constant 0 : i32
    %c0_i32_0 = arith.constant 0 : i32
    return %arg0, %c0_i32 : i32, i32
  }
}

</mosaic_0001>

<llo_original>
// kernel: tpu_custom_call.1
$region0: #{tpu_custom_call.1}
  #allocation0 [shape = 'u32[]', space=smem, size = 0x4, offset = 0x4, fixed_abs, tag = 'smem constant byte address 0x4 - core index']
  #allocation1 [shape = 'u32[72,128]{1,0:T(1,128)}', space=vmem, size = 0x9000, scoped, tag = 'internal scratch']
  #allocation2 [shape = 'f32[2,2]{1,0:T(2,128)}', space=vmem, size = 0x400, scoped, tag = 'scratch operand']
  #allocation3 [shape = 'f32[2,4]{1,0:T(2,128)}', space=vmem, size = 0x400, scoped, tag = 'scratch operand']
  %s0 = inlined_call_operand.hbm [shape: f32[8,16], index: 0, kind: input, shape index: {}]
  %s1 = inlined_call_operand.hbm [shape: f32[2,16], index: 1, kind: input, shape index: {}]
  %s2 = inlined_call_operand.hbm [shape: f32[2,2], index: 2, kind: output, shape index: {}]
  %s3 = sld [smem:[#allocation0]]
  $region34: #{tpu_custom_call.1} parent=0
    _
  %s5 = ssub.s32 1, %s3
  %s6 = scalar_select 0, %s5, %s3
  $region1: #{tpu_custom_call.1} parent=0
    #allocation4 [shape = 'u8[4096]{0}', space=smem, size = 0x1000, scoped, tag = 'input window, operand 0, single buffered']
    #allocation5 [shape = 's32[1]{0}', space=sflag, size = 0x4, scoped, tag = 'scoped memory for tpu_custom_call.1']
    #allocation6 [shape = 's32[1]{0}', space=sflag, size = 0x4, scoped, tag = 'scoped memory for tpu_custom_call.1']
    #allocation7 [shape = 's32[1]{0}', space=sflag, size = 0x4, scoped, tag = 'scoped memory for tpu_custom_call.1']
    #allocation8 [shape = 'u8[1024]{0}', space=vmem, size = 0x400, scoped, tag = 'input window, operand 1, single buffered']
    #allocation9 [shape = 'u8[1024]{0}', space=vmem, size = 0x400, scoped, tag = 'output window, operand 0, single buffered']
    %7 = vsyncpa [#allocation7], 0
    %8 = vsyncpa [#allocation5], 0
    %9 = vsyncpa [#allocation6], 0
    // Predicated region
    $region2: #{tpu_custom_call.1} parent=1 // pred_check
      _
    $region3: #{tpu_custom_call.1} parent=1 // pred_check_branch
      %11 = sbr.rel (0) target = $region5
    $region4: #{tpu_custom_call.1} parent=1 // pred_region
      %13 = vsyncadd [#allocation7], 0
      %s15 = sshll.u32 %s0, 4
      %s16 = int_to_ptr.hbm [resolvable:$true] %s15
      %18 = dma.hbm_to_smem %s16, 128, [#allocation4], [#allocation7]
    $region5: #{tpu_custom_call.1} parent=1 // pred_fallthru
      _
    // Predicated region
    $region6: #{tpu_custom_call.1} parent=1 // pred_check
      _
    $region7: #{tpu_custom_call.1} parent=1 // pred_check_branch
      %20 = sbr.rel (0) target = $region9
    $region8: #{tpu_custom_call.1} parent=1 // pred_region
      %22 = vsyncadd [#allocation5], 0
      %s24 = sshll.u32 %s1, 4
      %s25 = int_to_ptr.hbm [resolvable:$true] %s24
      %s26 = sshll.u32 [#allocation8], 4
      %s27 = int_to_ptr.vmem [resolvable:$true] %s26
      %29 = dma.hbm_to_vmem [thread:$0]  %s25, 32, %s27, [#allocation5]
    $region9: #{tpu_custom_call.1} parent=1 // pred_fallthru
      _
    // Predicated region
    $region10: #{tpu_custom_call.1} parent=1 // pred_check
      _
    $region11: #{tpu_custom_call.1} parent=1 // pred_check_branch
      %31 = sbr.rel (0) target = $region13
    $region12: #{tpu_custom_call.1} parent=1 // pred_region
      %33 = dma.done [#allocation7], 128
    $region13: #{tpu_custom_call.1} parent=1 // pred_fallthru
      _
    // Predicated region
    $region14: #{tpu_custom_call.1} parent=1 // pred_check
      _
    $region15: #{tpu_custom_call.1} parent=1 // pred_check_branch
      %35 = sbr.rel (0) target = $region17
    $region16: #{tpu_custom_call.1} parent=1 // pred_region
      %37 = dma.done [#allocation5], 32
    $region17: #{tpu_custom_call.1} parent=1 // pred_fallthru
      _
    %38 = sfence
    %p39 = scmp.eq.s32.totalorder 0, 0
    // Predicated region
    $region18: #{tpu_custom_call.1} parent=1 // pred_check
      %p40 = pneg %p39
    $region19: #{tpu_custom_call.1} parent=1 // pred_check_branch
      %42 = sbr.rel (%p40) target = $region21
    $region20: #{tpu_custom_call.1} parent=1 // pred_region
      %s43 = sld [smem:[#allocation4 + $0x8]]
      %v44 = vstv %s43
      %s45 = sld [smem:[#allocation4 + $0x9]]
      %v46 = vstv %s45
      %vm47 = vcmask 7168
      %v48 = vsel %vm47, %v44, %v46
      %vm49 = vcmask 9216
      %50 = vst.msk [vmem:[#allocation2] sm:$0x3] %vm49, %v48
    $region21: #{tpu_custom_call.1} parent=1 // pred_fallthru
      _
    %v51 = vld [vmem:[#allocation8] sm:$0x3]
    %s52 = sld [smem:[#allocation4]]
    %s53 = sld [smem:[#allocation4 + $0x1]]
    %s54 = sld [smem:[#allocation4 + $0x2]]
    %s55 = sld [smem:[#allocation4 + $0x3]]
    %s56 = sld [smem:[#allocation4 + $0x4]]
    %s57 = sld [smem:[#allocation4 + $0x5]]
    %v58 = vstv %s52
    %v59 = vmul.f32 %v58, %v51
    %v60 = vstv %s53
    %v61 = vmul.f32 %v60, %v51
    %63 = vrot.lane.b32.xlu0 %v61, 127
    %v64 = vpop.permute.xlu0 %63
    %v66 = vadd.f32 %v59, %v64
    %v67 = vstv %s54
    %v68 = vmul.f32 %v67, %v51
    %70 = vrot.lane.b32.xlu0 %v68, 126
    %v71 = vpop.permute.xlu0 %70
    %v73 = vadd.f32 %v66, %v71
    %v74 = vstv %s55
    %v75 = vmul.f32 %v74, %v51
    %77 = vrot.lane.b32.xlu0 %v75, 125
    %v78 = vpop.permute.xlu0 %77
    %v80 = vadd.f32 %v73, %v78
    %v81 = vstv %s56
    %v82 = vmul.f32 %v81, %v51
    %84 = vrot.lane.b32.xlu0 %v82, 124
    %v85 = vpop.permute.xlu0 %84
    %v87 = vadd.f32 %v80, %v85
    %v88 = vstv %s57
    %v89 = vadd.f32 %v87, %v88
    %v90 = vmax.f32 %v89, 0.0
    %vm91 = vcmask 91136
    %v92 = vsel %vm91, %v90, 0.0
    %93 = vadd.xlane.f32.xlu0 %v92
    %v94 = vpop.xlane.xlu0 %93
    %s95 = sld [smem:[#allocation4 + $0x6]]
    %v96 = vstv %s95
    %v97 = vmul.f32 %v94, %v96
    %s98 = sld [smem:[#allocation4 + $0x7]]
    %v99 = vstv %s98
    %v100 = vmul.f32 %v94, %v99
    %s101 = sld [smem:[#allocation4 + $0x80]]
    %s102 = sld [smem:[#allocation4 + $0x81]]
    %s103 = sld [smem:[#allocation4 + $0x82]]
    %s104 = sld [smem:[#allocation4 + $0x83]]
    %s105 = sld [smem:[#allocation4 + $0x84]]
    %s106 = sld [smem:[#allocation4 + $0x85]]
    %v107 = vstv %s101
    %v108 = vmul.f32 %v107, %v51
    %v109 = vstv %s102
    %v110 = vmul.f32 %v109, %v51
    %112 = vrot.lane.b32.xlu0 %v110, 127
    %v113 = vpop.permute.xlu0 %112
    %v115 = vadd.f32 %v108, %v113
    %v116 = vstv %s103
    %v117 = vmul.f32 %v116, %v51
    %119 = vrot.lane.b32.xlu0 %v117, 126
    %v120 = vpop.permute.xlu0 %119
    %v122 = vadd.f32 %v115, %v120
    %v123 = vstv %s104
    %v124 = vmul.f32 %v123, %v51
    %126 = vrot.lane.b32.xlu0 %v124, 125
    %v127 = vpop.permute.xlu0 %126
    %v129 = vadd.f32 %v122, %v127
    %v130 = vstv %s105
    %v131 = vmul.f32 %v130, %v51
    %133 = vrot.lane.b32.xlu0 %v131, 124
    %v134 = vpop.permute.xlu0 %133
    %v136 = vadd.f32 %v129, %v134
    %v137 = vstv %s106
    %v138 = vadd.f32 %v136, %v137
    %v139 = vmax.f32 %v138, 0.0
    %v140 = vsel %vm91, %v139, 0.0
    %141 = vadd.xlane.f32.xlu0 %v140
    %v142 = vpop.xlane.xlu0 %141
    %s143 = sld [smem:[#allocation4 + $0x86]]
    %v144 = vstv %s143
    %v145 = vmul.f32 %v142, %v144
    %v146 = vadd.f32 %v97, %v145
    %s147 = sld [smem:[#allocation4 + $0x87]]
    %v148 = vstv %s147
    %v149 = vmul.f32 %v142, %v148
    %v150 = vadd.f32 %v100, %v149
    %s151 = sld [smem:[#allocation4 + $0x100]]
    %s152 = sld [smem:[#allocation4 + $0x101]]
    %s153 = sld [smem:[#allocation4 + $0x102]]
    %s154 = sld [smem:[#allocation4 + $0x103]]
    %s155 = sld [smem:[#allocation4 + $0x104]]
    %s156 = sld [smem:[#allocation4 + $0x105]]
    %v157 = vstv %s151
    %v158 = vmul.f32 %v157, %v51
    %v159 = vstv %s152
    %v160 = vmul.f32 %v159, %v51
    %162 = vrot.lane.b32.xlu0 %v160, 127
    %v163 = vpop.permute.xlu0 %162
    %v165 = vadd.f32 %v158, %v163
    %v166 = vstv %s153
    %v167 = vmul.f32 %v166, %v51
    %169 = vrot.lane.b32.xlu0 %v167, 126
    %v170 = vpop.permute.xlu0 %169
    %v172 = vadd.f32 %v165, %v170
    %v173 = vstv %s154
    %v174 = vmul.f32 %v173, %v51
    %176 = vrot.lane.b32.xlu0 %v174, 125
    %v177 = vpop.permute.xlu0 %176
    %v179 = vadd.f32 %v172, %v177
    %v180 = vstv %s155
    %v181 = vmul.f32 %v180, %v51
    %183 = vrot.lane.b32.xlu0 %v181, 124
    %v184 = vpop.permute.xlu0 %183
    %v186 = vadd.f32 %v179, %v184
    %v187 = vstv %s156
    %v188 = vadd.f32 %v186, %v187
    %v189 = vmax.f32 %v188, 0.0
    %v190 = vsel %vm91, %v189, 0.0
    %191 = vadd.xlane.f32.xlu0 %v190
    %v192 = vpop.xlane.xlu0 %191
    %s193 = sld [smem:[#allocation4 + $0x106]]
    %v194 = vstv %s193
    %v195 = vmul.f32 %v192, %v194
    %v196 = vadd.f32 %v146, %v195
    %s197 = sld [smem:[#allocation4 + $0x107]]
    %v198 = vstv %s197
    %v199 = vmul.f32 %v192, %v198
    %v200 = vadd.f32 %v150, %v199
    %s201 = sld [smem:[#allocation4 + $0x180]]
    %s202 = sld [smem:[#allocation4 + $0x181]]
    %s203 = sld [smem:[#allocation4 + $0x182]]
    %s204 = sld [smem:[#allocation4 + $0x183]]
    %s205 = sld [smem:[#allocation4 + $0x184]]
    %s206 = sld [smem:[#allocation4 + $0x185]]
    %v207 = vstv %s201
    %v208 = vmul.f32 %v207, %v51
    %v209 = vstv %s202
    %v210 = vmul.f32 %v209, %v51
    %212 = vrot.lane.b32.xlu0 %v210, 127
    %v213 = vpop.permute.xlu0 %212
    %v215 = vadd.f32 %v208, %v213
    %v216 = vstv %s203
    %v217 = vmul.f32 %v216, %v51
    %219 = vrot.lane.b32.xlu0 %v217, 126
    %v220 = vpop.permute.xlu0 %219
    %v222 = vadd.f32 %v215, %v220
    %v223 = vstv %s204
    %v224 = vmul.f32 %v223, %v51
    %226 = vrot.lane.b32.xlu0 %v224, 125
    %v227 = vpop.permute.xlu0 %226
    %v229 = vadd.f32 %v222, %v227
    %v230 = vstv %s205
    %v231 = vmul.f32 %v230, %v51
    %233 = vrot.lane.b32.xlu0 %v231, 124
    %v234 = vpop.permute.xlu0 %233
    %v236 = vadd.f32 %v229, %v234
    %v237 = vstv %s206
    %v238 = vadd.f32 %v236, %v237
    %v239 = vmax.f32 %v238, 0.0
    %v240 = vsel %vm91, %v239, 0.0
    %241 = vadd.xlane.f32.xlu0 %v240
    %v242 = vpop.xlane.xlu0 %241
    %s243 = sld [smem:[#allocation4 + $0x186]]
    %v244 = vstv %s243
    %v245 = vmul.f32 %v242, %v244
    %v246 = vadd.f32 %v196, %v245
    %s247 = sld [smem:[#allocation4 + $0x187]]
    %v248 = vstv %s247
    %v249 = vmul.f32 %v242, %v248
    %v250 = vadd.f32 %v200, %v249
    %s251 = sld [smem:[#allocation4 + $0x200]]
    %s252 = sld [smem:[#allocation4 + $0x201]]
    %s253 = sld [smem:[#allocation4 + $0x202]]
    %s254 = sld [smem:[#allocation4 + $0x203]]
    %s255 = sld [smem:[#allocation4 + $0x204]]
    %s256 = sld [smem:[#allocation4 + $0x205]]
    %v257 = vstv %s251
    %v258 = vmul.f32 %v257, %v51
    %v259 = vstv %s252
    %v260 = vmul.f32 %v259, %v51
    %262 = vrot.lane.b32.xlu0 %v260, 127
    %v263 = vpop.permute.xlu0 %262
    %v265 = vadd.f32 %v258, %v263
    %v266 = vstv %s253
    %v267 = vmul.f32 %v266, %v51
    %269 = vrot.lane.b32.xlu0 %v267, 126
    %v270 = vpop.permute.xlu0 %269
    %v272 = vadd.f32 %v265, %v270
    %v273 = vstv %s254
    %v274 = vmul.f32 %v273, %v51
    %276 = vrot.lane.b32.xlu0 %v274, 125
    %v277 = vpop.permute.xlu0 %276
    %v279 = vadd.f32 %v272, %v277
    %v280 = vstv %s255
    %v281 = vmul.f32 %v280, %v51
    %283 = vrot.lane.b32.xlu0 %v281, 124
    %v284 = vpop.permute.xlu0 %283
    %v286 = vadd.f32 %v279, %v284
    %v287 = vstv %s256
    %v288 = vadd.f32 %v286, %v287
    %v289 = vmax.f32 %v288, 0.0
    %v290 = vsel %vm91, %v289, 0.0
    %291 = vadd.xlane.f32.xlu0 %v290
    %v292 = vpop.xlane.xlu0 %291
    %s293 = sld [smem:[#allocation4 + $0x206]]
    %v294 = vstv %s293
    %v295 = vmul.f32 %v292, %v294
    %v296 = vadd.f32 %v246, %v295
    %s297 = sld [smem:[#allocation4 + $0x207]]
    %v298 = vstv %s297
    %v299 = vmul.f32 %v292, %v298
    %v300 = vadd.f32 %v250, %v299
    %s301 = sld [smem:[#allocation4 + $0x280]]
    %s302 = sld [smem:[#allocation4 + $0x281]]
    %s303 = sld [smem:[#allocation4 + $0x282]]
    %s304 = sld [smem:[#allocation4 + $0x283]]
    %s305 = sld [smem:[#allocation4 + $0x284]]
    %s306 = sld [smem:[#allocation4 + $0x285]]
    %v307 = vstv %s301
    %v308 = vmul.f32 %v307, %v51
    %v309 = vstv %s302
    %v310 = vmul.f32 %v309, %v51
    %312 = vrot.lane.b32.xlu0 %v310, 127
    %v313 = vpop.permute.xlu0 %312
    %v315 = vadd.f32 %v308, %v313
    %v316 = vstv %s303
    %v317 = vmul.f32 %v316, %v51
    %319 = vrot.lane.b32.xlu0 %v317, 126
    %v320 = vpop.permute.xlu0 %319
    %v322 = vadd.f32 %v315, %v320
    %v323 = vstv %s304
    %v324 = vmul.f32 %v323, %v51
    %326 = vrot.lane.b32.xlu0 %v324, 125
    %v327 = vpop.permute.xlu0 %326
    %v329 = vadd.f32 %v322, %v327
    %v330 = vstv %s305
    %v331 = vmul.f32 %v330, %v51
    %333 = vrot.lane.b32.xlu0 %v331, 124
    %v334 = vpop.permute.xlu0 %333
    %v336 = vadd.f32 %v329, %v334
    %v337 = vstv %s306
    %v338 = vadd.f32 %v336, %v337
    %v339 = vmax.f32 %v338, 0.0
    %v340 = vsel %vm91, %v339, 0.0
    %341 = vadd.xlane.f32.xlu0 %v340
    %v342 = vpop.xlane.xlu0 %341
    %s343 = sld [smem:[#allocation4 + $0x286]]
    %v344 = vstv %s343
    %v345 = vmul.f32 %v342, %v344
    %v346 = vadd.f32 %v296, %v345
    %s347 = sld [smem:[#allocation4 + $0x287]]
    %v348 = vstv %s347
    %v349 = vmul.f32 %v342, %v348
    %v350 = vadd.f32 %v300, %v349
    %s351 = sld [smem:[#allocation4 + $0x300]]
    %s352 = sld [smem:[#allocation4 + $0x301]]
    %s353 = sld [smem:[#allocation4 + $0x302]]
    %s354 = sld [smem:[#allocation4 + $0x303]]
    %s355 = sld [smem:[#allocation4 + $0x304]]
    %s356 = sld [smem:[#allocation4 + $0x305]]
    %v357 = vstv %s351
    %v358 = vmul.f32 %v357, %v51
    %v359 = vstv %s352
    %v360 = vmul.f32 %v359, %v51
    %362 = vrot.lane.b32.xlu0 %v360, 127
    %v363 = vpop.permute.xlu0 %362
    %v365 = vadd.f32 %v358, %v363
    %v366 = vstv %s353
    %v367 = vmul.f32 %v366, %v51
    %369 = vrot.lane.b32.xlu0 %v367, 126
    %v370 = vpop.permute.xlu0 %369
    %v372 = vadd.f32 %v365, %v370
    %v373 = vstv %s354
    %v374 = vmul.f32 %v373, %v51
    %376 = vrot.lane.b32.xlu0 %v374, 125
    %v377 = vpop.permute.xlu0 %376
    %v379 = vadd.f32 %v372, %v377
    %v380 = vstv %s355
    %v381 = vmul.f32 %v380, %v51
    %383 = vrot.lane.b32.xlu0 %v381, 124
    %v384 = vpop.permute.xlu0 %383
    %v386 = vadd.f32 %v379, %v384
    %v387 = vstv %s356
    %v388 = vadd.f32 %v386, %v387
    %v389 = vmax.f32 %v388, 0.0
    %v390 = vsel %vm91, %v389, 0.0
    %391 = vadd.xlane.f32.xlu0 %v390
    %v392 = vpop.xlane.xlu0 %391
    %s393 = sld [smem:[#allocation4 + $0x306]]
    %v394 = vstv %s393
    %v395 = vmul.f32 %v392, %v394
    %v396 = vadd.f32 %v346, %v395
    %s397 = sld [smem:[#allocation4 + $0x307]]
    %v398 = vstv %s397
    %v399 = vmul.f32 %v392, %v398
    %v400 = vadd.f32 %v350, %v399
    %s401 = sld [smem:[#allocation4 + $0x380]]
    %s402 = sld [smem:[#allocation4 + $0x381]]
    %s403 = sld [smem:[#allocation4 + $0x382]]
    %s404 = sld [smem:[#allocation4 + $0x383]]
    %s405 = sld [smem:[#allocation4 + $0x384]]
    %s406 = sld [smem:[#allocation4 + $0x385]]
    %v407 = vstv %s401
    %v408 = vmul.f32 %v407, %v51
    %v409 = vstv %s402
    %v410 = vmul.f32 %v409, %v51
    %412 = vrot.lane.b32.xlu0 %v410, 127
    %v413 = vpop.permute.xlu0 %412
    %v415 = vadd.f32 %v408, %v413
    %v416 = vstv %s403
    %v417 = vmul.f32 %v416, %v51
    %419 = vrot.lane.b32.xlu0 %v417, 126
    %v420 = vpop.permute.xlu0 %419
    %v422 = vadd.f32 %v415, %v420
    %v423 = vstv %s404
    %v424 = vmul.f32 %v423, %v51
    %426 = vrot.lane.b32.xlu0 %v424, 125
    %v427 = vpop.permute.xlu0 %426
    %v429 = vadd.f32 %v422, %v427
    %v430 = vstv %s405
    %v431 = vmul.f32 %v430, %v51
    %433 = vrot.lane.b32.xlu0 %v431, 124
    %v434 = vpop.permute.xlu0 %433
    %v436 = vadd.f32 %v429, %v434
    %v437 = vstv %s406
    %v438 = vadd.f32 %v436, %v437
    %v439 = vmax.f32 %v438, 0.0
    %v440 = vsel %vm91, %v439, 0.0
    %441 = vadd.xlane.f32.xlu0 %v440
    %v442 = vpop.xlane.xlu0 %441
    %s443 = sld [smem:[#allocation4 + $0x386]]
    %v444 = vstv %s443
    %v445 = vmul.f32 %v442, %v444
    %v446 = vadd.f32 %v396, %v445
    %s447 = sld [smem:[#allocation4 + $0x387]]
    %v448 = vstv %s447
    %v449 = vmul.f32 %v442, %v448
    %v450 = vadd.f32 %v400, %v449
    %v451 = vld [vmem:[#allocation2] sm:$0x3]
    %vm452 = vcmask 7168
    %v453 = vsel %vm452, %v446, %v450
    %v454 = vadd.f32 %v451, %v453
    %vm455 = vcmask 9216
    %456 = vst.msk [vmem:[#allocation2] sm:$0x3] %vm455, %v454
    // Predicated region
    $region22: #{tpu_custom_call.1} parent=1 // pred_check
      %p457 = pneg %p39
    $region23: #{tpu_custom_call.1} parent=1 // pred_check_branch
      %459 = sbr.rel (%p457) target = $region25
    $region24: #{tpu_custom_call.1} parent=1 // pred_region
      %v460 = vld [vmem:[#allocation2] sm:$0x3]
      %461 = vst.msk [vmem:[#allocation9] sm:$0x3] %vm455, %v460
    $region25: #{tpu_custom_call.1} parent=1 // pred_fallthru
      _
    // Predicated region
    $region26: #{tpu_custom_call.1} parent=1 // pred_check
      _
    $region27: #{tpu_custom_call.1} parent=1 // pred_check_branch
      %463 = sbr.rel (0) target = $region29
    $region28: #{tpu_custom_call.1} parent=1 // pred_region
      %465 = vsyncadd [#allocation6], 0
      %s467 = sshll.u32 [#allocation9], 4
      %s468 = int_to_ptr.vmem [resolvable:$true] %s467
      %s469 = sshll.u32 %s2, 4
      %s470 = int_to_ptr.hbm [resolvable:$true] %s469
      %472 = dma.vmem_to_hbm [thread:$0]  %s468, 32, %s470, [#allocation6]
    $region29: #{tpu_custom_call.1} parent=1 // pred_fallthru
      _
    // Predicated region
    $region30: #{tpu_custom_call.1} parent=1 // pred_check
      _
    $region31: #{tpu_custom_call.1} parent=1 // pred_check_branch
      %474 = sbr.rel (0) target = $region33
    $region32: #{tpu_custom_call.1} parent=1 // pred_region
      %476 = dma.done [#allocation6], 32
    $region33: #{tpu_custom_call.1} parent=1 // pred_fallthru
      _
    %477 = vsyncpa [#allocation5], 1
    %478 = vsyncpa [#allocation6], 1
    %479 = vsyncpa [#allocation7], 1

</llo_original>
